<compile_context>
chip_gen: v7x
topology: tpu7x:2x2x1
jax: 0.10.0
libtpu: 0.0.40
codegen_flags: <defaults>
</compile_context>

<pallas_src>
import functools
import math

import jax
import jax.numpy as jnp
from jax import lax
from jax.experimental import pallas as pl
from jax.experimental.pallas import tpu as pltpu


def _round_up(x, m):
    return ((x + m - 1) // m) * m


def _tpu_vmem_capacity_bytes():
    """Physical VMEM per core, with a conservative fallback (v7x = 64 MiB)."""
    try:
        info = pltpu.get_tpu_info()
        cap = getattr(info, "vmem_capacity_bytes", None)
        if cap:
            return int(cap)
    except Exception:
        pass
    return 64 * 1024 * 1024


def _repeat_lanes(x, reps):
    """Concatenate `reps` copies of x along the last axis in O(log reps) concats.

    Fallback path only (L not 1 and not a multiple of 128)."""
    if reps == 1:
        return x
    result = None
    power = x
    r = reps
    while r > 0:
        if r & 1:
            result = power if result is None else jnp.concatenate([result, power], axis=-1)
        r >>= 1
        if r:
            power = jnp.concatenate([power, power], axis=-1)
    return result


def _diffloss_kernel(diff_ref, s_ref, out_ref, *,
                     n_red, lane_l, tp, nb, n_valid_tail, needs_mask):
    # diff_ref: (tp, R*L) in its original dtype, lane-dense.
    # s_ref:    (tp, L)
    # out_ref:  (1, 1, 1) f32 per-block partial sum.
    s = s_ref[...].astype(jnp.float32)                       # (tp, L)

    if lane_l == 1:
        d = diff_ref[...].astype(jnp.float32)                # (tp, R)
        contrib = jnp.sum(d * d, axis=-1, keepdims=True) * s  # (tp, 1)
    elif lane_l % 128 == 0:
        # Reduce over R first: R aligned lane chunks -> (tp, L) partial, then
        # one multiply by S (no lane broadcast, no wide f32 accumulator).
        acc = None
        for k in range(n_red):
            c = diff_ref[:, k * lane_l:(k + 1) * lane_l].astype(jnp.float32)
            c2 = c * c
            acc = c2 if acc is None else acc + c2
        contrib = acc * s                                     # (tp, L)
    else:
        # TODO(synk): awkward L (not 1, not a multiple of 128) falls back to a
        # lane-concat broadcast of S; an MXU tiled-identity reduction would be
        # faster but routes squares through bf16 (numerics).
        d = diff_ref[...].astype(jnp.float32)                 # (tp, R*L)
        w = _repeat_lanes(s, n_red)                           # (tp, R*L)
        contrib = jnp.sum((d * d) * w, axis=-1, keepdims=True)  # (tp, 1)

    if needs_mask:
        # Only the last block can contain out-of-range rows; gate the masking
        # so interior blocks pay nothing.  Masking after the multiply makes
        # garbage (even NaN) rows contribute exactly 0.
        is_tail = pl.program_id(0) == nb - 1

        @pl.when(is_tail)
        def _masked():
            row = lax.broadcasted_iota(jnp.int32, (tp, 1), 0)
            masked = jnp.where(row < n_valid_tail, contrib, 0.0)
            out_ref[...] = jnp.sum(masked).reshape(1, 1, 1)

        @pl.when(jnp.logical_not(is_tail))
        def _plain():
            out_ref[...] = jnp.sum(contrib).reshape(1, 1, 1)
    else:
        out_ref[...] = jnp.sum(contrib).reshape(1, 1, 1)


def _weighted_sq_sum(diff_flat, s_flat, n_red, lane_l, max_block_rows=None):
    """sum over all (p, r, l) of diff[p, r*L + l]**2 * S[p, l]  (fp32 scalar)."""
    p, rl = diff_flat.shape

    # Generation-aware VMEM sizing: limit = min(phys/2, 64 MiB), budget = 3/4 of it.
    #   v5e/v6e (128 MiB phys) -> limit 64 MiB, budget 48 MiB
    #   v7x     ( 64 MiB phys) -> limit 32 MiB, budget 24 MiB
    cap = _tpu_vmem_capacity_bytes()
    vmem_limit = min(cap // 2, 64 * 1024 * 1024)
    budget = (vmem_limit * 3) // 4

    rl_pad = _round_up(rl, 128)
    l_pad = _round_up(lane_l, 128)
    d_item = jnp.dtype(diff_flat.dtype).itemsize
    s_item = jnp.dtype(s_flat.dtype).itemsize
    # Per-row working set: double-buffered input blocks + in-kernel f32 temporaries.
    if lane_l == 1:
        work = 2 * rl_pad * 4 + 2 * l_pad * 4           # f32 upcast of d + partials
    elif lane_l % 128 == 0:
        work = 4 * l_pad * 4 + 2 * l_pad * 4            # chunk temp + (tp,L) partials
    else:
        work = 4 * rl_pad * 4 + 2 * l_pad * 4           # concat-broadcast fallback
    bytes_per_row = 2 * rl_pad * d_item + 2 * l_pad * s_item + work

    if p <= 8:
        tp = p                                          # full dim (layout-legal)
    else:
        tp = (budget // bytes_per_row) // 8 * 8
        tp = max(8, min(tp, _round_up(p, 8)))
        if max_block_rows is not None:                  # test / tuning knob
            tp = max(8, min(tp, (max_block_rows // 8) * 8))
    # TODO(synk): no lane-axis (R*L) tiling fallback — an extreme R*L could
    # exceed the VMEM budget even at tp=8 and fail to compile (loud, not silent).

    nb = (p + tp - 1) // tp
    needs_mask = (p % tp) != 0
    n_valid_tail = p - (nb - 1) * tp

    kernel = functools.partial(
        _diffloss_kernel, n_red=n_red, lane_l=lane_l, tp=tp, nb=nb,
        n_valid_tail=n_valid_tail, needs_mask=needs_mask)

    partials = pl.pallas_call(
        kernel,
        out_shape=jax.ShapeDtypeStruct((nb, 1, 1), jnp.float32),
        grid=(nb,),
        in_specs=[
            pl.BlockSpec((tp, rl), lambda i: (i, 0)),
            pl.BlockSpec((tp, lane_l), lambda i: (i, 0)),
        ],
        out_specs=pl.BlockSpec((1, 1, 1), lambda i: (i, 0, 0)),
        compiler_params=pltpu.CompilerParams(
            dimension_semantics=("parallel",),
            vmem_limit_bytes=vmem_limit,
        ),
    )(diff_flat, s_flat)
    return jnp.sum(partials)


def diff_loss(diff, S, *, _max_block_rows=None):
    """Pallas implementation of DiffLoss.forward(diff, S)."""
    diff = jnp.asarray(diff)
    S = jnp.asarray(S)

    reduce_dim = 3 if S.ndim == 4 else 2
    assert diff.ndim >= reduce_dim + 1, (
        f"diff must have at least {reduce_dim + 1} dims, got shape {diff.shape}")

    lead = diff.shape[:reduce_dim]
    trail = diff.shape[reduce_dim + 1:]
    assert S.shape == lead + trail, (
        "kernel expects sum(diff**2, reduce_dim).shape == S.shape; "
        f"got {lead + trail} vs {S.shape}")
    # TODO(synk): torch-style broadcasting between sum(diff**2) and a
    # shape-mismatched S is not fused into the kernel; only the exact
    # elementwise case is handled.

    P = math.prod(lead) if lead else 1
    R = diff.shape[reduce_dim]
    L = math.prod(trail) if trail else 1

    # Free contiguous views only — no transpose / pad copies in HBM.
    diff_flat = diff.reshape(P, R * L)
    s_flat = S.reshape(P, L)

    total = _weighted_sq_sum(diff_flat, s_flat, R, L, max_block_rows=_max_block_rows)

    if S.ndim == 4:
        # sum over dims (1,2), then mean over the remaining (s0, s3) entries.
        return total / (S.shape[0] * S.shape[3])
    return total


if __name__ == "__main__":
    key = jax.random.PRNGKey(0)
    k1, k2, k3, k4, k5, k6, k7, k8 = jax.random.split(key, 8)

    # ---- Branch 1: S is 4D, lane-aligned trailing dim (fast aligned path) ----
    # diff: (B, N, M, R, L); sum over dim=3 -> (B, N, M, L) == S.shape
    diff4 = jax.random.normal(k1, (2, 4, 8, 16, 128), dtype=jnp.float32)
    S4 = jax.random.uniform(k2, (2, 4, 8, 128), dtype=jnp.float32)
    out4 = diff_loss(diff4, S4)
    ref4 = jnp.mean(jnp.sum(jnp.sum(diff4 ** 2, axis=3) * S4, axis=(1, 2)))

    # ---- Branch 2: S is not 4D (2D mask) -> L == 1 path ----
    # diff: (B, N, D); sum over dim=2 -> (B, N) == S.shape
    diff3 = jax.random.normal(k3, (2, 16, 32), dtype=jnp.float32)
    S2 = jax.random.uniform(k4, (2, 16), dtype=jnp.float32)
    out3 = diff_loss(diff3, S2)
    ref3 = jnp.sum(jnp.sum(diff3 ** 2, axis=2) * S2)

    # ---- Branch 1 with an awkward trailing dim (general-L fallback path) ----
    diff4b = jax.random.normal(k5, (2, 4, 8, 32, 16), dtype=jnp.float32)
    S4b = jax.random.uniform(k6, (2, 4, 8, 16), dtype=jnp.float32)
    out4b = diff_loss(diff4b, S4b)
    ref4b = jnp.mean(jnp.sum(jnp.sum(diff4b ** 2, axis=3) * S4b, axis=(1, 2)))

    # ---- Branch 2 with forced small row tiles: multi-block + masked tail ----
    diff3b = jax.random.normal(k7, (3, 10, 32), dtype=jnp.float32)   # P = 30
    S2b = jax.random.uniform(k8, (3, 10), dtype=jnp.float32)
    out3b = diff_loss(diff3b, S2b, _max_block_rows=8)
    ref3b = jnp.sum(jnp.sum(diff3b ** 2, axis=2) * S2b)

    jax.block_until_ready((out4, out3, out4b, out3b))
    assert jnp.allclose(out4, ref4, rtol=1e-3, atol=1e-3), (out4, ref4)
    assert jnp.allclose(out3, ref3, rtol=1e-3, atol=1e-3), (out3, ref3)
    assert jnp.allclose(out4b, ref4b, rtol=1e-3, atol=1e-3), (out4b, ref4b)
    assert jnp.allclose(out3b, ref3b, rtol=1e-3, atol=1e-3), (out3b, ref3b)
    print("KERNEL_OK")
</pallas_src>

<mosaic_0001>
module attributes {stable_mosaic.version = 11 : i64} {
  func.func @_diffloss_kernel(%arg0: i32, %arg1: memref<64x2048xf32, #tpu.memory_space<vmem>>, %arg2: memref<64x128xf32, #tpu.memory_space<vmem>>, %arg3: memref<1x1x1xf32, #tpu.memory_space<vmem>>) attributes {dimension_semantics = [#tpu.dimension_semantics<parallel>], iteration_bounds = array<i64: 1>, scalar_prefetch = 0 : i64, scratch_operands = 0 : i64, tpu.core_type = #tpu.core_type<tc>, window_params = [{transform_indices = @transform_0, window_bounds = array<i64: 64, 2048>}, {transform_indices = @transform_1, window_bounds = array<i64: 64, 128>}, {transform_indices = @transform_2, window_bounds = array<i64: 1, 1, 1>}]} {
    %c0 = arith.constant 0 : index
    %c0_0 = arith.constant 0 : index
    %0 = vector.load %arg2[%c0, %c0_0] : memref<64x128xf32, #tpu.memory_space<vmem>>, vector<64x128xf32>
    %c0_1 = arith.constant 0 : index
    %c0_2 = arith.constant 0 : index
    %1 = vector.load %arg1[%c0_1, %c0_2] : memref<64x2048xf32, #tpu.memory_space<vmem>>, vector<64x128xf32>
    %2 = arith.mulf %1, %1 : vector<64x128xf32>
    %c0_3 = arith.constant 0 : index
    %c128 = arith.constant 128 : index
    %3 = vector.load %arg1[%c0_3, %c128] : memref<64x2048xf32, #tpu.memory_space<vmem>>, vector<64x128xf32>
    %4 = arith.mulf %3, %3 : vector<64x128xf32>
    %5 = arith.addf %2, %4 : vector<64x128xf32>
    %c0_4 = arith.constant 0 : index
    %c256 = arith.constant 256 : index
    %6 = vector.load %arg1[%c0_4, %c256] : memref<64x2048xf32, #tpu.memory_space<vmem>>, vector<64x128xf32>
    %7 = arith.mulf %6, %6 : vector<64x128xf32>
    %8 = arith.addf %5, %7 : vector<64x128xf32>
    %c0_5 = arith.constant 0 : index
    %c384 = arith.constant 384 : index
    %9 = vector.load %arg1[%c0_5, %c384] : memref<64x2048xf32, #tpu.memory_space<vmem>>, vector<64x128xf32>
    %10 = arith.mulf %9, %9 : vector<64x128xf32>
    %11 = arith.addf %8, %10 : vector<64x128xf32>
    %c0_6 = arith.constant 0 : index
    %c512 = arith.constant 512 : index
    %12 = vector.load %arg1[%c0_6, %c512] : memref<64x2048xf32, #tpu.memory_space<vmem>>, vector<64x128xf32>
    %13 = arith.mulf %12, %12 : vector<64x128xf32>
    %14 = arith.addf %11, %13 : vector<64x128xf32>
    %c0_7 = arith.constant 0 : index
    %c640 = arith.constant 640 : index
    %15 = vector.load %arg1[%c0_7, %c640] : memref<64x2048xf32, #tpu.memory_space<vmem>>, vector<64x128xf32>
    %16 = arith.mulf %15, %15 : vector<64x128xf32>
    %17 = arith.addf %14, %16 : vector<64x128xf32>
    %c0_8 = arith.constant 0 : index
    %c768 = arith.constant 768 : index
    %18 = vector.load %arg1[%c0_8, %c768] : memref<64x2048xf32, #tpu.memory_space<vmem>>, vector<64x128xf32>
    %19 = arith.mulf %18, %18 : vector<64x128xf32>
    %20 = arith.addf %17, %19 : vector<64x128xf32>
    %c0_9 = arith.constant 0 : index
    %c896 = arith.constant 896 : index
    %21 = vector.load %arg1[%c0_9, %c896] : memref<64x2048xf32, #tpu.memory_space<vmem>>, vector<64x128xf32>
    %22 = arith.mulf %21, %21 : vector<64x128xf32>
    %23 = arith.addf %20, %22 : vector<64x128xf32>
    %c0_10 = arith.constant 0 : index
    %c1024 = arith.constant 1024 : index
    %24 = vector.load %arg1[%c0_10, %c1024] : memref<64x2048xf32, #tpu.memory_space<vmem>>, vector<64x128xf32>
    %25 = arith.mulf %24, %24 : vector<64x128xf32>
    %26 = arith.addf %23, %25 : vector<64x128xf32>
    %c0_11 = arith.constant 0 : index
    %c1152 = arith.constant 1152 : index
    %27 = vector.load %arg1[%c0_11, %c1152] : memref<64x2048xf32, #tpu.memory_space<vmem>>, vector<64x128xf32>
    %28 = arith.mulf %27, %27 : vector<64x128xf32>
    %29 = arith.addf %26, %28 : vector<64x128xf32>
    %c0_12 = arith.constant 0 : index
    %c1280 = arith.constant 1280 : index
    %30 = vector.load %arg1[%c0_12, %c1280] : memref<64x2048xf32, #tpu.memory_space<vmem>>, vector<64x128xf32>
    %31 = arith.mulf %30, %30 : vector<64x128xf32>
    %32 = arith.addf %29, %31 : vector<64x128xf32>
    %c0_13 = arith.constant 0 : index
    %c1408 = arith.constant 1408 : index
    %33 = vector.load %arg1[%c0_13, %c1408] : memref<64x2048xf32, #tpu.memory_space<vmem>>, vector<64x128xf32>
    %34 = arith.mulf %33, %33 : vector<64x128xf32>
    %35 = arith.addf %32, %34 : vector<64x128xf32>
    %c0_14 = arith.constant 0 : index
    %c1536 = arith.constant 1536 : index
    %36 = vector.load %arg1[%c0_14, %c1536] : memref<64x2048xf32, #tpu.memory_space<vmem>>, vector<64x128xf32>
    %37 = arith.mulf %36, %36 : vector<64x128xf32>
    %38 = arith.addf %35, %37 : vector<64x128xf32>
    %c0_15 = arith.constant 0 : index
    %c1664 = arith.constant 1664 : index
    %39 = vector.load %arg1[%c0_15, %c1664] : memref<64x2048xf32, #tpu.memory_space<vmem>>, vector<64x128xf32>
    %40 = arith.mulf %39, %39 : vector<64x128xf32>
    %41 = arith.addf %38, %40 : vector<64x128xf32>
    %c0_16 = arith.constant 0 : index
    %c1792 = arith.constant 1792 : index
    %42 = vector.load %arg1[%c0_16, %c1792] : memref<64x2048xf32, #tpu.memory_space<vmem>>, vector<64x128xf32>
    %43 = arith.mulf %42, %42 : vector<64x128xf32>
    %44 = arith.addf %41, %43 : vector<64x128xf32>
    %c0_17 = arith.constant 0 : index
    %c1920 = arith.constant 1920 : index
    %45 = vector.load %arg1[%c0_17, %c1920] : memref<64x2048xf32, #tpu.memory_space<vmem>>, vector<64x128xf32>
    %46 = arith.mulf %45, %45 : vector<64x128xf32>
    %47 = arith.addf %44, %46 : vector<64x128xf32>
    %48 = arith.mulf %47, %0 : vector<64x128xf32>
    %49 = vector.shape_cast %48 : vector<64x128xf32> to vector<1x64x128xf32>
    %cst = arith.constant dense<0.000000e+00> : vector<1xf32>
    %50 = vector.multi_reduction <add>, %49, %cst [1, 2] : vector<1x64x128xf32> to vector<1xf32>
    %51 = vector.shape_cast %50 : vector<1xf32> to vector<1x1x1xf32>
    %52 = vector.extract %51[0, 0, 0] : f32 from vector<1x1x1xf32>
    %53 = vector.broadcast %52 : f32 to vector<1x1x1xf32>
    %c0_18 = arith.constant 0 : index
    %c0_19 = arith.constant 0 : index
    %c0_20 = arith.constant 0 : index
    %54 = vector.load %arg3[%c0_18, %c0_19, %c0_20] : memref<1x1x1xf32, #tpu.memory_space<vmem>>, vector<1x1x1xf32>
    tpu.vector_store %arg3[%c0_18, %c0_19, %c0_20], %53 {strides = array<i32>} : memref<1x1x1xf32, #tpu.memory_space<vmem>>, vector<1x1x1xf32>,
    return
  }
  func.func @transform_0(%arg0: i32) -> (i32, i32) {
    %c0_i32 = arith.constant 0 : i32
    %c0_i32_0 = arith.constant 0 : i32
    return %arg0, %c0_i32 : i32, i32
  }
  func.func @transform_1(%arg0: i32) -> (i32, i32) {
    %c0_i32 = arith.constant 0 : i32
    %c0_i32_0 = arith.constant 0 : i32
    return %arg0, %c0_i32 : i32, i32
  }
  func.func @transform_2(%arg0: i32) -> (i32, i32, i32) {
    %c0_i32 = arith.constant 0 : i32
    %c0_i32_0 = arith.constant 0 : i32
    %c0_i32_1 = arith.constant 0 : i32
    return %arg0, %c0_i32, %c0_i32_0 : i32, i32, i32
  }
}

</mosaic_0001>

<llo_original>
// kernel: tpu_custom_call.1
$region0: #{tpu_custom_call.1}
  #allocation0 [shape = 'u32[]', space=smem, size = 0x4, offset = 0x4, fixed_abs, tag = 'smem constant byte address 0x4 - core index']
  #allocation1 [shape = 'u32[144,128]{1,0:T(1,128)}', space=vmem, size = 0x12000, scoped, tag = 'internal scratch']
  %s0 = inlined_call_operand.hbm [shape: f32[64,2048], index: 0, kind: input, shape index: {}]
  %s1 = inlined_call_operand.hbm [shape: f32[64,128], index: 1, kind: input, shape index: {}]
  %s2 = inlined_call_operand.hbm [shape: f32[1,1,1], index: 2, kind: output, shape index: {}]
  %s3 = sld [smem:[#allocation0]]
  $region26: #{tpu_custom_call.1} parent=0
    _
  %s5 = ssub.s32 1, %s3
  %s6 = scalar_select 0, %s5, %s3
  $region1: #{tpu_custom_call.1} parent=0
    #allocation2 [shape = 'u8[524288]{0}', space=vmem, size = 0x80000, scoped, tag = 'input window, operand 0, single buffered']
    #allocation3 [shape = 's32[1]{0}', space=sflag, size = 0x4, scoped, tag = 'scoped memory for tpu_custom_call.1']
    #allocation4 [shape = 's32[1]{0}', space=sflag, size = 0x4, scoped, tag = 'scoped memory for tpu_custom_call.1']
    #allocation5 [shape = 'u8[32768]{0}', space=vmem, size = 0x8000, scoped, tag = 'input window, operand 1, single buffered']
    #allocation6 [shape = 's32[1]{0}', space=sflag, size = 0x4, scoped, tag = 'scoped memory for tpu_custom_call.1']
    #allocation7 [shape = 'u8[512]{0}', space=vmem, size = 0x400, scoped, tag = 'output window, operand 0, single buffered']
    %7 = vsyncpa [#allocation3], 0
    %8 = vsyncpa [#allocation6], 0
    %9 = vsyncpa [#allocation4], 0
    // Predicated region
    $region2: #{tpu_custom_call.1} parent=1 // pred_check
      _
    $region3: #{tpu_custom_call.1} parent=1 // pred_check_branch
      %11 = sbr.rel (0) target = $region5
    $region4: #{tpu_custom_call.1} parent=1 // pred_region
      %s13 = ssub.s32 16384, 16384
      %14 = vsyncadd [#allocation3], %s13
      %s15 = sshll.u32 [#allocation2], 4
      %s16 = int_to_ptr.vmem [resolvable:$true] %s15
      %21 = dma.hbm_to_vmem [thread:$0]  %s0, 16384, %s16, [#allocation3], 2048, 2048, 128
    $region5: #{tpu_custom_call.1} parent=1 // pred_fallthru
      _
    // Predicated region
    $region6: #{tpu_custom_call.1} parent=1 // pred_check
      _
    $region7: #{tpu_custom_call.1} parent=1 // pred_check_branch
      %23 = sbr.rel (0) target = $region9
    $region8: #{tpu_custom_call.1} parent=1 // pred_region
      %s25 = ssub.s32 1024, 1024
      %26 = vsyncadd [#allocation6], %s25
      %s27 = sshll.u32 [#allocation5], 4
      %s28 = int_to_ptr.vmem [resolvable:$true] %s27
      %33 = dma.hbm_to_vmem [thread:$0]  %s1, 1024, %s28, [#allocation6], 128, 128, 8
    $region9: #{tpu_custom_call.1} parent=1 // pred_fallthru
      _
    // Predicated region
    $region10: #{tpu_custom_call.1} parent=1 // pred_check
      _
    $region11: #{tpu_custom_call.1} parent=1 // pred_check_branch
      %35 = sbr.rel (0) target = $region13
    $region12: #{tpu_custom_call.1} parent=1 // pred_region
      %36 = dma.done [#allocation3], 16384
    $region13: #{tpu_custom_call.1} parent=1 // pred_fallthru
      _
    // Predicated region
    $region14: #{tpu_custom_call.1} parent=1 // pred_check
      _
    $region15: #{tpu_custom_call.1} parent=1 // pred_check_branch
      %38 = sbr.rel (0) target = $region17
    $region16: #{tpu_custom_call.1} parent=1 // pred_region
      %39 = dma.done [#allocation6], 1024
    $region17: #{tpu_custom_call.1} parent=1 // pred_fallthru
      _
    %v40 = vld [vmem:[#allocation5] sm:$0xff]
    %v41 = vld [vmem:[#allocation5 + $0x8] sm:$0xff]
    %v42 = vld [vmem:[#allocation5 + $0x10] sm:$0xff]
    %v43 = vld [vmem:[#allocation5 + $0x18] sm:$0xff]
    %v44 = vld [vmem:[#allocation5 + $0x20] sm:$0xff]
    %v45 = vld [vmem:[#allocation5 + $0x28] sm:$0xff]
    %v46 = vld [vmem:[#allocation5 + $0x30] sm:$0xff]
    %v47 = vld [vmem:[#allocation5 + $0x38] sm:$0xff]
    %v48 = vld [vmem:[#allocation2] sm:$0xff]
    %v49 = vld [vmem:[#allocation2 + $0x80] sm:$0xff]
    %v50 = vld [vmem:[#allocation2 + $0x100] sm:$0xff]
    %v51 = vld [vmem:[#allocation2 + $0x180] sm:$0xff]
    %v52 = vld [vmem:[#allocation2 + $0x200] sm:$0xff]
    %v53 = vld [vmem:[#allocation2 + $0x280] sm:$0xff]
    %v54 = vld [vmem:[#allocation2 + $0x300] sm:$0xff]
    %v55 = vld [vmem:[#allocation2 + $0x380] sm:$0xff]
    %v56 = vmul.f32 %v48, %v48
    %v57 = vmul.f32 %v49, %v49
    %v58 = vmul.f32 %v50, %v50
    %v59 = vmul.f32 %v51, %v51
    %v60 = vmul.f32 %v52, %v52
    %v61 = vmul.f32 %v53, %v53
    %v62 = vmul.f32 %v54, %v54
    %v63 = vmul.f32 %v55, %v55
    %v64 = vld [vmem:[#allocation2 + $0x8] sm:$0xff]
    %v65 = vld [vmem:[#allocation2 + $0x88] sm:$0xff]
    %v66 = vld [vmem:[#allocation2 + $0x108] sm:$0xff]
    %v67 = vld [vmem:[#allocation2 + $0x188] sm:$0xff]
    %v68 = vld [vmem:[#allocation2 + $0x208] sm:$0xff]
    %v69 = vld [vmem:[#allocation2 + $0x288] sm:$0xff]
    %v70 = vld [vmem:[#allocation2 + $0x308] sm:$0xff]
    %v71 = vld [vmem:[#allocation2 + $0x388] sm:$0xff]
    %v72 = vmul.f32 %v64, %v64
    %v73 = vmul.f32 %v65, %v65
    %v74 = vmul.f32 %v66, %v66
    %v75 = vmul.f32 %v67, %v67
    %v76 = vmul.f32 %v68, %v68
    %v77 = vmul.f32 %v69, %v69
    %v78 = vmul.f32 %v70, %v70
    %v79 = vmul.f32 %v71, %v71
    %v80 = vadd.f32 %v56, %v72
    %v81 = vadd.f32 %v57, %v73
    %v82 = vadd.f32 %v58, %v74
    %v83 = vadd.f32 %v59, %v75
    %v84 = vadd.f32 %v60, %v76
    %v85 = vadd.f32 %v61, %v77
    %v86 = vadd.f32 %v62, %v78
    %v87 = vadd.f32 %v63, %v79
    %v88 = vld [vmem:[#allocation2 + $0x10] sm:$0xff]
    %v89 = vld [vmem:[#allocation2 + $0x90] sm:$0xff]
    %v90 = vld [vmem:[#allocation2 + $0x110] sm:$0xff]
    %v91 = vld [vmem:[#allocation2 + $0x190] sm:$0xff]
    %v92 = vld [vmem:[#allocation2 + $0x210] sm:$0xff]
    %v93 = vld [vmem:[#allocation2 + $0x290] sm:$0xff]
    %v94 = vld [vmem:[#allocation2 + $0x310] sm:$0xff]
    %v95 = vld [vmem:[#allocation2 + $0x390] sm:$0xff]
    %v96 = vmul.f32 %v88, %v88
    %v97 = vmul.f32 %v89, %v89
    %v98 = vmul.f32 %v90, %v90
    %v99 = vmul.f32 %v91, %v91
    %v100 = vmul.f32 %v92, %v92
    %v101 = vmul.f32 %v93, %v93
    %v102 = vmul.f32 %v94, %v94
    %v103 = vmul.f32 %v95, %v95
    %v104 = vadd.f32 %v80, %v96
    %v105 = vadd.f32 %v81, %v97
    %v106 = vadd.f32 %v82, %v98
    %v107 = vadd.f32 %v83, %v99
    %v108 = vadd.f32 %v84, %v100
    %v109 = vadd.f32 %v85, %v101
    %v110 = vadd.f32 %v86, %v102
    %v111 = vadd.f32 %v87, %v103
    %v112 = vld [vmem:[#allocation2 + $0x18] sm:$0xff]
    %v113 = vld [vmem:[#allocation2 + $0x98] sm:$0xff]
    %v114 = vld [vmem:[#allocation2 + $0x118] sm:$0xff]
    %v115 = vld [vmem:[#allocation2 + $0x198] sm:$0xff]
    %v116 = vld [vmem:[#allocation2 + $0x218] sm:$0xff]
    %v117 = vld [vmem:[#allocation2 + $0x298] sm:$0xff]
    %v118 = vld [vmem:[#allocation2 + $0x318] sm:$0xff]
    %v119 = vld [vmem:[#allocation2 + $0x398] sm:$0xff]
    %v120 = vmul.f32 %v112, %v112
    %v121 = vmul.f32 %v113, %v113
    %v122 = vmul.f32 %v114, %v114
    %v123 = vmul.f32 %v115, %v115
    %v124 = vmul.f32 %v116, %v116
    %v125 = vmul.f32 %v117, %v117
    %v126 = vmul.f32 %v118, %v118
    %v127 = vmul.f32 %v119, %v119
    %v128 = vadd.f32 %v104, %v120
    %v129 = vadd.f32 %v105, %v121
    %v130 = vadd.f32 %v106, %v122
    %v131 = vadd.f32 %v107, %v123
    %v132 = vadd.f32 %v108, %v124
    %v133 = vadd.f32 %v109, %v125
    %v134 = vadd.f32 %v110, %v126
    %v135 = vadd.f32 %v111, %v127
    %v136 = vld [vmem:[#allocation2 + $0x20] sm:$0xff]
    %v137 = vld [vmem:[#allocation2 + $0xa0] sm:$0xff]
    %v138 = vld [vmem:[#allocation2 + $0x120] sm:$0xff]
    %v139 = vld [vmem:[#allocation2 + $0x1a0] sm:$0xff]
    %v140 = vld [vmem:[#allocation2 + $0x220] sm:$0xff]
    %v141 = vld [vmem:[#allocation2 + $0x2a0] sm:$0xff]
    %v142 = vld [vmem:[#allocation2 + $0x320] sm:$0xff]
    %v143 = vld [vmem:[#allocation2 + $0x3a0] sm:$0xff]
    %v144 = vmul.f32 %v136, %v136
    %v145 = vmul.f32 %v137, %v137
    %v146 = vmul.f32 %v138, %v138
    %v147 = vmul.f32 %v139, %v139
    %v148 = vmul.f32 %v140, %v140
    %v149 = vmul.f32 %v141, %v141
    %v150 = vmul.f32 %v142, %v142
    %v151 = vmul.f32 %v143, %v143
    %v152 = vadd.f32 %v128, %v144
    %v153 = vadd.f32 %v129, %v145
    %v154 = vadd.f32 %v130, %v146
    %v155 = vadd.f32 %v131, %v147
    %v156 = vadd.f32 %v132, %v148
    %v157 = vadd.f32 %v133, %v149
    %v158 = vadd.f32 %v134, %v150
    %v159 = vadd.f32 %v135, %v151
    %v160 = vld [vmem:[#allocation2 + $0x28] sm:$0xff]
    %v161 = vld [vmem:[#allocation2 + $0xa8] sm:$0xff]
    %v162 = vld [vmem:[#allocation2 + $0x128] sm:$0xff]
    %v163 = vld [vmem:[#allocation2 + $0x1a8] sm:$0xff]
    %v164 = vld [vmem:[#allocation2 + $0x228] sm:$0xff]
    %v165 = vld [vmem:[#allocation2 + $0x2a8] sm:$0xff]
    %v166 = vld [vmem:[#allocation2 + $0x328] sm:$0xff]
    %v167 = vld [vmem:[#allocation2 + $0x3a8] sm:$0xff]
    %v168 = vmul.f32 %v160, %v160
    %v169 = vmul.f32 %v161, %v161
    %v170 = vmul.f32 %v162, %v162
    %v171 = vmul.f32 %v163, %v163
    %v172 = vmul.f32 %v164, %v164
    %v173 = vmul.f32 %v165, %v165
    %v174 = vmul.f32 %v166, %v166
    %v175 = vmul.f32 %v167, %v167
    %v176 = vadd.f32 %v152, %v168
    %v177 = vadd.f32 %v153, %v169
    %v178 = vadd.f32 %v154, %v170
    %v179 = vadd.f32 %v155, %v171
    %v180 = vadd.f32 %v156, %v172
    %v181 = vadd.f32 %v157, %v173
    %v182 = vadd.f32 %v158, %v174
    %v183 = vadd.f32 %v159, %v175
    %v184 = vld [vmem:[#allocation2 + $0x30] sm:$0xff]
    %v185 = vld [vmem:[#allocation2 + $0xb0] sm:$0xff]
    %v186 = vld [vmem:[#allocation2 + $0x130] sm:$0xff]
    %v187 = vld [vmem:[#allocation2 + $0x1b0] sm:$0xff]
    %v188 = vld [vmem:[#allocation2 + $0x230] sm:$0xff]
    %v189 = vld [vmem:[#allocation2 + $0x2b0] sm:$0xff]
    %v190 = vld [vmem:[#allocation2 + $0x330] sm:$0xff]
    %v191 = vld [vmem:[#allocation2 + $0x3b0] sm:$0xff]
    %v192 = vmul.f32 %v184, %v184
    %v193 = vmul.f32 %v185, %v185
    %v194 = vmul.f32 %v186, %v186
    %v195 = vmul.f32 %v187, %v187
    %v196 = vmul.f32 %v188, %v188
    %v197 = vmul.f32 %v189, %v189
    %v198 = vmul.f32 %v190, %v190
    %v199 = vmul.f32 %v191, %v191
    %v200 = vadd.f32 %v176, %v192
    %v201 = vadd.f32 %v177, %v193
    %v202 = vadd.f32 %v178, %v194
    %v203 = vadd.f32 %v179, %v195
    %v204 = vadd.f32 %v180, %v196
    %v205 = vadd.f32 %v181, %v197
    %v206 = vadd.f32 %v182, %v198
    %v207 = vadd.f32 %v183, %v199
    %v208 = vld [vmem:[#allocation2 + $0x38] sm:$0xff]
    %v209 = vld [vmem:[#allocation2 + $0xb8] sm:$0xff]
    %v210 = vld [vmem:[#allocation2 + $0x138] sm:$0xff]
    %v211 = vld [vmem:[#allocation2 + $0x1b8] sm:$0xff]
    %v212 = vld [vmem:[#allocation2 + $0x238] sm:$0xff]
    %v213 = vld [vmem:[#allocation2 + $0x2b8] sm:$0xff]
    %v214 = vld [vmem:[#allocation2 + $0x338] sm:$0xff]
    %v215 = vld [vmem:[#allocation2 + $0x3b8] sm:$0xff]
    %v216 = vmul.f32 %v208, %v208
    %v217 = vmul.f32 %v209, %v209
    %v218 = vmul.f32 %v210, %v210
    %v219 = vmul.f32 %v211, %v211
    %v220 = vmul.f32 %v212, %v212
    %v221 = vmul.f32 %v213, %v213
    %v222 = vmul.f32 %v214, %v214
    %v223 = vmul.f32 %v215, %v215
    %v224 = vadd.f32 %v200, %v216
    %v225 = vadd.f32 %v201, %v217
    %v226 = vadd.f32 %v202, %v218
    %v227 = vadd.f32 %v203, %v219
    %v228 = vadd.f32 %v204, %v220
    %v229 = vadd.f32 %v205, %v221
    %v230 = vadd.f32 %v206, %v222
    %v231 = vadd.f32 %v207, %v223
    %v232 = vld [vmem:[#allocation2 + $0x40] sm:$0xff]
    %v233 = vld [vmem:[#allocation2 + $0xc0] sm:$0xff]
    %v234 = vld [vmem:[#allocation2 + $0x140] sm:$0xff]
    %v235 = vld [vmem:[#allocation2 + $0x1c0] sm:$0xff]
    %v236 = vld [vmem:[#allocation2 + $0x240] sm:$0xff]
    %v237 = vld [vmem:[#allocation2 + $0x2c0] sm:$0xff]
    %v238 = vld [vmem:[#allocation2 + $0x340] sm:$0xff]
    %v239 = vld [vmem:[#allocation2 + $0x3c0] sm:$0xff]
    %v240 = vmul.f32 %v232, %v232
    %v241 = vmul.f32 %v233, %v233
    %v242 = vmul.f32 %v234, %v234
    %v243 = vmul.f32 %v235, %v235
    %v244 = vmul.f32 %v236, %v236
    %v245 = vmul.f32 %v237, %v237
    %v246 = vmul.f32 %v238, %v238
    %v247 = vmul.f32 %v239, %v239
    %v248 = vadd.f32 %v224, %v240
    %v249 = vadd.f32 %v225, %v241
    %v250 = vadd.f32 %v226, %v242
    %v251 = vadd.f32 %v227, %v243
    %v252 = vadd.f32 %v228, %v244
    %v253 = vadd.f32 %v229, %v245
    %v254 = vadd.f32 %v230, %v246
    %v255 = vadd.f32 %v231, %v247
    %v256 = vld [vmem:[#allocation2 + $0x48] sm:$0xff]
    %v257 = vld [vmem:[#allocation2 + $0xc8] sm:$0xff]
    %v258 = vld [vmem:[#allocation2 + $0x148] sm:$0xff]
    %v259 = vld [vmem:[#allocation2 + $0x1c8] sm:$0xff]
    %v260 = vld [vmem:[#allocation2 + $0x248] sm:$0xff]
    %v261 = vld [vmem:[#allocation2 + $0x2c8] sm:$0xff]
    %v262 = vld [vmem:[#allocation2 + $0x348] sm:$0xff]
    %v263 = vld [vmem:[#allocation2 + $0x3c8] sm:$0xff]
    %v264 = vmul.f32 %v256, %v256
    %v265 = vmul.f32 %v257, %v257
    %v266 = vmul.f32 %v258, %v258
    %v267 = vmul.f32 %v259, %v259
    %v268 = vmul.f32 %v260, %v260
    %v269 = vmul.f32 %v261, %v261
    %v270 = vmul.f32 %v262, %v262
    %v271 = vmul.f32 %v263, %v263
    %v272 = vadd.f32 %v248, %v264
    %v273 = vadd.f32 %v249, %v265
    %v274 = vadd.f32 %v250, %v266
    %v275 = vadd.f32 %v251, %v267
    %v276 = vadd.f32 %v252, %v268
    %v277 = vadd.f32 %v253, %v269
    %v278 = vadd.f32 %v254, %v270
    %v279 = vadd.f32 %v255, %v271
    %v280 = vld [vmem:[#allocation2 + $0x50] sm:$0xff]
    %v281 = vld [vmem:[#allocation2 + $0xd0] sm:$0xff]
    %v282 = vld [vmem:[#allocation2 + $0x150] sm:$0xff]
    %v283 = vld [vmem:[#allocation2 + $0x1d0] sm:$0xff]
    %v284 = vld [vmem:[#allocation2 + $0x250] sm:$0xff]
    %v285 = vld [vmem:[#allocation2 + $0x2d0] sm:$0xff]
    %v286 = vld [vmem:[#allocation2 + $0x350] sm:$0xff]
    %v287 = vld [vmem:[#allocation2 + $0x3d0] sm:$0xff]
    %v288 = vmul.f32 %v280, %v280
    %v289 = vmul.f32 %v281, %v281
    %v290 = vmul.f32 %v282, %v282
    %v291 = vmul.f32 %v283, %v283
    %v292 = vmul.f32 %v284, %v284
    %v293 = vmul.f32 %v285, %v285
    %v294 = vmul.f32 %v286, %v286
    %v295 = vmul.f32 %v287, %v287
    %v296 = vadd.f32 %v272, %v288
    %v297 = vadd.f32 %v273, %v289
    %v298 = vadd.f32 %v274, %v290
    %v299 = vadd.f32 %v275, %v291
    %v300 = vadd.f32 %v276, %v292
    %v301 = vadd.f32 %v277, %v293
    %v302 = vadd.f32 %v278, %v294
    %v303 = vadd.f32 %v279, %v295
    %v304 = vld [vmem:[#allocation2 + $0x58] sm:$0xff]
    %v305 = vld [vmem:[#allocation2 + $0xd8] sm:$0xff]
    %v306 = vld [vmem:[#allocation2 + $0x158] sm:$0xff]
    %v307 = vld [vmem:[#allocation2 + $0x1d8] sm:$0xff]
    %v308 = vld [vmem:[#allocation2 + $0x258] sm:$0xff]
    %v309 = vld [vmem:[#allocation2 + $0x2d8] sm:$0xff]
    %v310 = vld [vmem:[#allocation2 + $0x358] sm:$0xff]
    %v311 = vld [vmem:[#allocation2 + $0x3d8] sm:$0xff]
    %v312 = vmul.f32 %v304, %v304
    %v313 = vmul.f32 %v305, %v305
    %v314 = vmul.f32 %v306, %v306
    %v315 = vmul.f32 %v307, %v307
    %v316 = vmul.f32 %v308, %v308
    %v317 = vmul.f32 %v309, %v309
    %v318 = vmul.f32 %v310, %v310
    %v319 = vmul.f32 %v311, %v311
    %v320 = vadd.f32 %v296, %v312
    %v321 = vadd.f32 %v297, %v313
    %v322 = vadd.f32 %v298, %v314
    %v323 = vadd.f32 %v299, %v315
    %v324 = vadd.f32 %v300, %v316
    %v325 = vadd.f32 %v301, %v317
    %v326 = vadd.f32 %v302, %v318
    %v327 = vadd.f32 %v303, %v319
    %v328 = vld [vmem:[#allocation2 + $0x60] sm:$0xff]
    %v329 = vld [vmem:[#allocation2 + $0xe0] sm:$0xff]
    %v330 = vld [vmem:[#allocation2 + $0x160] sm:$0xff]
    %v331 = vld [vmem:[#allocation2 + $0x1e0] sm:$0xff]
    %v332 = vld [vmem:[#allocation2 + $0x260] sm:$0xff]
    %v333 = vld [vmem:[#allocation2 + $0x2e0] sm:$0xff]
    %v334 = vld [vmem:[#allocation2 + $0x360] sm:$0xff]
    %v335 = vld [vmem:[#allocation2 + $0x3e0] sm:$0xff]
    %v336 = vmul.f32 %v328, %v328
    %v337 = vmul.f32 %v329, %v329
    %v338 = vmul.f32 %v330, %v330
    %v339 = vmul.f32 %v331, %v331
    %v340 = vmul.f32 %v332, %v332
    %v341 = vmul.f32 %v333, %v333
    %v342 = vmul.f32 %v334, %v334
    %v343 = vmul.f32 %v335, %v335
    %v344 = vadd.f32 %v320, %v336
    %v345 = vadd.f32 %v321, %v337
    %v346 = vadd.f32 %v322, %v338
    %v347 = vadd.f32 %v323, %v339
    %v348 = vadd.f32 %v324, %v340
    %v349 = vadd.f32 %v325, %v341
    %v350 = vadd.f32 %v326, %v342
    %v351 = vadd.f32 %v327, %v343
    %v352 = vld [vmem:[#allocation2 + $0x68] sm:$0xff]
    %v353 = vld [vmem:[#allocation2 + $0xe8] sm:$0xff]
    %v354 = vld [vmem:[#allocation2 + $0x168] sm:$0xff]
    %v355 = vld [vmem:[#allocation2 + $0x1e8] sm:$0xff]
    %v356 = vld [vmem:[#allocation2 + $0x268] sm:$0xff]
    %v357 = vld [vmem:[#allocation2 + $0x2e8] sm:$0xff]
    %v358 = vld [vmem:[#allocation2 + $0x368] sm:$0xff]
    %v359 = vld [vmem:[#allocation2 + $0x3e8] sm:$0xff]
    %v360 = vmul.f32 %v352, %v352
    %v361 = vmul.f32 %v353, %v353
    %v362 = vmul.f32 %v354, %v354
    %v363 = vmul.f32 %v355, %v355
    %v364 = vmul.f32 %v356, %v356
    %v365 = vmul.f32 %v357, %v357
    %v366 = vmul.f32 %v358, %v358
    %v367 = vmul.f32 %v359, %v359
    %v368 = vadd.f32 %v344, %v360
    %v369 = vadd.f32 %v345, %v361
    %v370 = vadd.f32 %v346, %v362
    %v371 = vadd.f32 %v347, %v363
    %v372 = vadd.f32 %v348, %v364
    %v373 = vadd.f32 %v349, %v365
    %v374 = vadd.f32 %v350, %v366
    %v375 = vadd.f32 %v351, %v367
    %v376 = vld [vmem:[#allocation2 + $0x70] sm:$0xff]
    %v377 = vld [vmem:[#allocation2 + $0xf0] sm:$0xff]
    %v378 = vld [vmem:[#allocation2 + $0x170] sm:$0xff]
    %v379 = vld [vmem:[#allocation2 + $0x1f0] sm:$0xff]
    %v380 = vld [vmem:[#allocation2 + $0x270] sm:$0xff]
    %v381 = vld [vmem:[#allocation2 + $0x2f0] sm:$0xff]
    %v382 = vld [vmem:[#allocation2 + $0x370] sm:$0xff]
    %v383 = vld [vmem:[#allocation2 + $0x3f0] sm:$0xff]
    %v384 = vmul.f32 %v376, %v376
    %v385 = vmul.f32 %v377, %v377
    %v386 = vmul.f32 %v378, %v378
    %v387 = vmul.f32 %v379, %v379
    %v388 = vmul.f32 %v380, %v380
    %v389 = vmul.f32 %v381, %v381
    %v390 = vmul.f32 %v382, %v382
    %v391 = vmul.f32 %v383, %v383
    %v392 = vadd.f32 %v368, %v384
    %v393 = vadd.f32 %v369, %v385
    %v394 = vadd.f32 %v370, %v386
    %v395 = vadd.f32 %v371, %v387
    %v396 = vadd.f32 %v372, %v388
    %v397 = vadd.f32 %v373, %v389
    %v398 = vadd.f32 %v374, %v390
    %v399 = vadd.f32 %v375, %v391
    %v400 = vld [vmem:[#allocation2 + $0x78] sm:$0xff]
    %v401 = vld [vmem:[#allocation2 + $0xf8] sm:$0xff]
    %v402 = vld [vmem:[#allocation2 + $0x178] sm:$0xff]
    %v403 = vld [vmem:[#allocation2 + $0x1f8] sm:$0xff]
    %v404 = vld [vmem:[#allocation2 + $0x278] sm:$0xff]
    %v405 = vld [vmem:[#allocation2 + $0x2f8] sm:$0xff]
    %v406 = vld [vmem:[#allocation2 + $0x378] sm:$0xff]
    %v407 = vld [vmem:[#allocation2 + $0x3f8] sm:$0xff]
    %v408 = vmul.f32 %v400, %v400
    %v409 = vmul.f32 %v401, %v401
    %v410 = vmul.f32 %v402, %v402
    %v411 = vmul.f32 %v403, %v403
    %v412 = vmul.f32 %v404, %v404
    %v413 = vmul.f32 %v405, %v405
    %v414 = vmul.f32 %v406, %v406
    %v415 = vmul.f32 %v407, %v407
    %v416 = vadd.f32 %v392, %v408
    %v417 = vadd.f32 %v393, %v409
    %v418 = vadd.f32 %v394, %v410
    %v419 = vadd.f32 %v395, %v411
    %v420 = vadd.f32 %v396, %v412
    %v421 = vadd.f32 %v397, %v413
    %v422 = vadd.f32 %v398, %v414
    %v423 = vadd.f32 %v399, %v415
    %v424 = vmul.f32 %v416, %v40
    %v425 = vmul.f32 %v417, %v41
    %v426 = vmul.f32 %v418, %v42
    %v427 = vmul.f32 %v419, %v43
    %v428 = vmul.f32 %v420, %v44
    %v429 = vmul.f32 %v421, %v45
    %v430 = vmul.f32 %v422, %v46
    %v431 = vmul.f32 %v423, %v47
    %v432 = vadd.f32 %v424, %v425
    %v433 = vadd.f32 %v432, %v426
    %v434 = vadd.f32 %v433, %v427
    %v435 = vadd.f32 %v434, %v428
    %v436 = vadd.f32 %v435, %v429
    %v437 = vadd.f32 %v436, %v430
    %v438 = vadd.f32 %v437, %v431
    %439 = vadd.xlane.f32.xlu0 %v438
    %v440 = vpop.xlane.xlu0 %439
    %v441 = vrot.slane %v440, 4
    %v442 = vadd.f32 %v440, %v441
    %v443 = vrot.slane %v442, 2
    %v444 = vadd.f32 %v442, %v443
    %v445 = vrot.slane %v444, 1
    %v446 = vadd.f32 %v444, %v445
    %s447 = vtos %v446
    %v448 = vstv %s447
    %vm449 = vcmask 0
    %450 = vst.msk [vmem:[#allocation7] sm:$0x1] %vm449, %v448
    // Predicated region
    $region18: #{tpu_custom_call.1} parent=1 // pred_check
      _
    $region19: #{tpu_custom_call.1} parent=1 // pred_check_branch
      %452 = sbr.rel (0) target = $region21
    $region20: #{tpu_custom_call.1} parent=1 // pred_region
      %s454 = ssub.s32 16, 16
      %455 = vsyncadd [#allocation4], %s454
      %s457 = sshll.u32 [#allocation7], 4
      %s458 = int_to_ptr.vmem [resolvable:$true] %s457
      %460 = dma.vmem_to_hbm [thread:$0]  %s458, 16, %s2, [#allocation4]
    $region21: #{tpu_custom_call.1} parent=1 // pred_fallthru
      _
    // Predicated region
    $region22: #{tpu_custom_call.1} parent=1 // pred_check
      _
    $region23: #{tpu_custom_call.1} parent=1 // pred_check_branch
      %462 = sbr.rel (0) target = $region25
    $region24: #{tpu_custom_call.1} parent=1 // pred_region
      %463 = dma.done [#allocation4], 16
    $region25: #{tpu_custom_call.1} parent=1 // pred_fallthru
      _
    %464 = vsyncpa [#allocation3], 1
    %465 = vsyncpa [#allocation6], 1
    %466 = vsyncpa [#allocation4], 1

</llo_original>
